<compile_context>
chip_gen: v7x
topology: tpu7x:2x2x1
jax: 0.10.0
libtpu: 0.0.40
codegen_flags: <defaults>
</compile_context>

<pallas_src>
import functools

import jax
import jax.numpy as jnp
from jax import lax
from jax.experimental import pallas as pl
from jax.experimental.pallas import tpu as pltpu

HIDDEN = 512   # fixed by nn.Linear(input_dim, 512)
OUT = 1        # fixed by nn.Linear(512, 1)


def _round_up(x, m):
    return ((x + m - 1) // m) * m


def _cdiv(a, b):
    return (a + b - 1) // b


def _vmem_plan():
    """Return (budget_bytes, vmem_limit_bytes), generation-aware, conservative."""
    cap = 64 * 1024 * 1024            # v7x per-TC VMEM; safe lower bound
    try:
        info = pltpu.get_tpu_info()
        cap = int(getattr(info, "vmem_capacity_bytes", cap))
    except Exception:
        pass
    budget = min(int(cap * 0.55), 64 * 1024 * 1024)
    limit = max(32 * 1024 * 1024, min(cap - (4 << 20), budget + (16 << 20)))
    return budget, int(limit)


def _block_spec(shape, index_map, n_buffers=2):
    """BlockSpec with optional >2-deep pipelining (ignored if unsupported)."""
    if n_buffers > 2 and hasattr(pl, "Buffered"):
        try:
            return pl.BlockSpec(shape, index_map, pipeline_mode=pl.Buffered(n_buffers))
        except TypeError:
            pass
    return pl.BlockSpec(shape, index_map)


def _resident_kernel(x_ref, w1_ref, b1_ref, w2_ref, b2_ref, o_ref):
    # x_ref : (block_b, D_in)  input dtype       VMEM (cast to bf16 here)
    # w1_ref: (D_in, H)        bf16, resident    VMEM
    # b1_ref: (1, H)           f32               VMEM
    # w2_ref: (1, H)           bf16              VMEM
    # b2_ref: (1, 1)           f32               SMEM
    # o_ref : (1, block_b)     f32 lane-dense    VMEM
    x = x_ref[...].astype(jnp.bfloat16)
    h = jnp.dot(x, w1_ref[...], preferred_element_type=jnp.float32)
    h = jnp.maximum(h + b1_ref[...], 0.0).astype(jnp.bfloat16)
    # Layer 2 as a lane-dense (1, block_b) row: w2 (1,H) · h (block_b,H).
    y = lax.dot_general(
        w2_ref[...], h,
        dimension_numbers=(((1,), (1,)), ((), ())),
        preferred_element_type=jnp.float32)
    o_ref[...] = y + b2_ref[0, 0]


def _tiled_kernel(x_ref, w1_ref, b1_ref, w2_ref, b2_ref, o_ref, acc_ref,
                  *, d_in, block_k):
    # Grid (nb, nk), K innermost; acc_ref (block_b, H) f32 scratch.
    k = pl.program_id(1)

    @pl.when(k == 0)
    def _():
        acc_ref[...] = jnp.zeros_like(acc_ref)

    x = x_ref[...]
    if d_in % block_k != 0:
        # Zero the K remainder of the edge block; W1 is zero-padded on K in
        # the wrapper, so padded products are exactly 0 (no x padding needed).
        col = lax.broadcasted_iota(jnp.int32, x.shape, 1) + k * block_k
        x = jnp.where(col < d_in, x, 0)

    acc_ref[...] += jnp.dot(x.astype(jnp.bfloat16), w1_ref[...],
                            preferred_element_type=jnp.float32)

    @pl.when(k == pl.num_programs(1) - 1)
    def _():
        h = jnp.maximum(acc_ref[...] + b1_ref[...], 0.0).astype(jnp.bfloat16)
        y = lax.dot_general(
            w2_ref[...], h,
            dimension_numbers=(((1,), (1,)), ((), ())),
            preferred_element_type=jnp.float32)
        o_ref[...] = y + b2_ref[0, 0]


def resnet_feature_extractor(x, w1, b1, w2, b2, *, block_b=None, block_k=None):
    """y = relu(x @ w1.T + b1) @ w2.T + b2.

    x: (B, D_in); w1: (H, D_in); b1: (H,); w2: (1, H); b2: (1,)  (PyTorch layouts).
    """
    B, D_in = x.shape
    H = w1.shape[0]
    x_item = jnp.dtype(x.dtype).itemsize
    budget, vmem_limit = _vmem_plan()

    # --- batch tiling -----------------------------------------------------
    if block_b is None:
        if B <= 256:
            block_b = B                                    # single full-extent tile
        else:
            # >= 2 tiles so both v7x TensorCores get work; multiple of 256.
            block_b = min(1024, _round_up(_cdiv(B, 2), 256))
    nb = _cdiv(B, block_b)
    b_pad = nb * block_b

    # --- weight prep (one-time): (H, D_in) -> (D_in, H) bf16 ---------------
    w1t = jnp.asarray(w1).astype(jnp.bfloat16).T           # (D_in, H)
    b1_r = jnp.asarray(b1, jnp.float32).reshape(1, H)
    w2_r = jnp.asarray(w2).astype(jnp.bfloat16).reshape(1, H)
    b2_r = jnp.asarray(b2, jnp.float32).reshape(1, 1)

    # --- decide: W1 fully resident (no K axis) vs K-tiled -------------------
    x_tile_bytes = block_b * D_in * x_item
    base_bytes = D_in * H * 2 + block_b * H * 4 + 8 * H + 4 * b_pad
    if block_k is not None:
        resident = block_k >= D_in
    else:
        resident = base_bytes + 2 * x_tile_bytes <= budget
    n_buf = 3 if (resident and nb >= 3 and base_bytes + 3 * x_tile_bytes <= budget) else 2

    flops = 2 * B * D_in * H + 2 * B * H

    if resident:
        grid = (nb,)
        in_specs = [
            _block_spec((block_b, D_in), lambda i: (i, 0), n_buf),   # x tile (streamed)
            pl.BlockSpec((D_in, H), lambda i: (0, 0)),               # W1, VMEM-resident
            pl.BlockSpec((1, H), lambda i: (0, 0)),                  # b1
            pl.BlockSpec((1, H), lambda i: (0, 0)),                  # w2 row (bf16)
            pl.BlockSpec(memory_space=pltpu.MemorySpace.SMEM),       # b2 scalar
        ]
        out_specs = pl.BlockSpec((1, block_b), lambda i: (0, i))
        scratch_shapes = []
        kernel = _resident_kernel
        dim_sem = ("parallel",)
        bytes_accessed = B * D_in * x_item + D_in * H * 2 + 6 * H + 4 + 4 * b_pad
    else:
        if block_k is None:
            per_k = 2 * (block_b * x_item + H * 2)         # double-buffered x + W1 slabs
            max_k = (budget - block_b * H * 4 - (1 << 20)) // per_k
            block_k = int(max(512, min(8192, (max_k // 128) * 128)))
        block_k = int(min(block_k, _round_up(D_in, 128)))
        nk = _cdiv(D_in, block_k)
        k_pad = nk * block_k
        # Zero-pad W1 on K only (one-time, weights only); x stays un-padded.
        if k_pad != D_in:
            w1t = jnp.zeros((k_pad, H), jnp.bfloat16).at[:D_in, :].set(w1t)

        grid = (nb, nk)
        in_specs = [
            pl.BlockSpec((block_b, block_k), lambda i, k: (i, k)),   # x tile
            pl.BlockSpec((block_k, H), lambda i, k: (k, 0)),         # W1 K-slab
            pl.BlockSpec((1, H), lambda i, k: (0, 0)),               # b1
            pl.BlockSpec((1, H), lambda i, k: (0, 0)),               # w2 row (bf16)
            pl.BlockSpec(memory_space=pltpu.MemorySpace.SMEM),       # b2 scalar
        ]
        out_specs = pl.BlockSpec((1, block_b), lambda i, k: (0, i))
        scratch_shapes = [pltpu.VMEM((block_b, H), jnp.float32)]
        kernel = functools.partial(_tiled_kernel, d_in=D_in, block_k=block_k)
        dim_sem = ("parallel", "arbitrary")
        bytes_accessed = (B * D_in * x_item + nb * k_pad * H * 2
                          + 6 * H + 4 + 4 * b_pad)

    out = pl.pallas_call(
        kernel,
        out_shape=jax.ShapeDtypeStruct((1, b_pad), jnp.float32),
        grid=grid,
        in_specs=in_specs,
        out_specs=out_specs,
        scratch_shapes=scratch_shapes,
        compiler_params=pltpu.CompilerParams(
            dimension_semantics=dim_sem,
            vmem_limit_bytes=int(vmem_limit),
        ),
        cost_estimate=pl.CostEstimate(
            flops=int(flops), transcendentals=0,
            bytes_accessed=int(bytes_accessed)),
    )(x, w1t, b1_r, w2_r, b2_r)

    # Lane-dense (1, b_pad) slab -> (B, 1) column; drop batch padding.
    return out[0, :B].reshape(B, OUT)


def reference_f32(x, w1, b1, w2, b2):
    h = jnp.maximum(x @ w1.T + b1[None, :], 0.0)
    return h @ w2.T + b2[None, :]


def reference_bf16(x, w1, b1, w2, b2):
    """Reference matching the kernel's bf16-operand / f32-accumulate numerics."""
    xb = x.astype(jnp.bfloat16)
    w1t = w1.astype(jnp.bfloat16).T
    h = jnp.dot(xb, w1t, preferred_element_type=jnp.float32) + b1[None, :]
    hb = jnp.maximum(h, 0.0).astype(jnp.bfloat16)
    w2b = w2.astype(jnp.bfloat16)
    return jnp.dot(hb, w2b.T, preferred_element_type=jnp.float32) + b2[None, :]


if __name__ == "__main__":
    key = jax.random.PRNGKey(0)

    def make_case(k, batch, d_in):
        k_x, k_w1, k_b1, k_w2, k_b2 = jax.random.split(k, 5)
        x = jax.random.normal(k_x, (batch, d_in), jnp.float32)
        w1 = jax.random.normal(k_w1, (HIDDEN, d_in), jnp.float32) / jnp.sqrt(d_in)
        b1 = jax.random.normal(k_b1, (HIDDEN,), jnp.float32) * 0.01
        w2 = jax.random.normal(k_w2, (OUT, HIDDEN), jnp.float32) / jnp.sqrt(HIDDEN)
        b2 = jax.random.normal(k_b2, (OUT,), jnp.float32) * 0.01
        return x, w1, b1, w2, b2

    keys = jax.random.split(key, 3)
    fwd = jax.jit(resnet_feature_extractor)
    fwd_tiled = jax.jit(functools.partial(resnet_feature_extractor, block_k=128))

    cases = [
        ("resident/tiny",        fwd,       make_case(keys[0], 8, 32)),
        ("tiled/K-remainder",    fwd_tiled, make_case(keys[1], 16, 300)),
        ("resident/batch-tiled", fwd,       make_case(keys[2], 300, 64)),
    ]

    for name, fn, args in cases:
        y = jax.block_until_ready(fn(*args))
        x, w1, b1, w2, b2 = args
        assert y.shape == (x.shape[0], OUT), name
        y_q = reference_bf16(x, w1, b1, w2, b2)
        y_f = reference_f32(x, w1, b1, w2, b2)
        assert jnp.allclose(y, y_q, atol=2e-2, rtol=2e-2), f"{name}: mismatch vs bf16 ref"
        assert jnp.allclose(y, y_f, atol=1e-1, rtol=1e-1), f"{name}: mismatch vs f32 ref"

    print("KERNEL_OK")
</pallas_src>

<mosaic_0001>
module attributes {stable_mosaic.version = 11 : i64} {
  func.func @_resident_kernel(%arg0: i32, %arg1: memref<8x32xf32, #tpu.memory_space<vmem>>, %arg2: memref<32x512xbf16, #tpu.memory_space<vmem>>, %arg3: memref<1x512xf32, #tpu.memory_space<vmem>>, %arg4: memref<1x512xbf16, #tpu.memory_space<vmem>>, %arg5: memref<1x1xf32, #tpu.memory_space<smem>>, %arg6: memref<1x8xf32, #tpu.memory_space<vmem>>) attributes {dimension_semantics = [#tpu.dimension_semantics<parallel>], iteration_bounds = array<i64: 1>, scalar_prefetch = 0 : i64, scratch_operands = 0 : i64, tpu.core_type = #tpu.core_type<tc>, window_params = [{transform_indices = @transform_0, window_bounds = array<i64: 8, 32>}, {pipeline_mode = #tpu.pipeline_mode<synchronous>, transform_indices = @transform_1, window_bounds = array<i64: 32, 512>}, {pipeline_mode = #tpu.pipeline_mode<synchronous>, transform_indices = @transform_2, window_bounds = array<i64: 1, 512>}, {pipeline_mode = #tpu.pipeline_mode<synchronous>, transform_indices = @transform_3, window_bounds = array<i64: 1, 512>}, {transform_indices = @transform_4, window_bounds = array<i64: 1, 1>}, {transform_indices = @transform_5, window_bounds = array<i64: 1, 8>}]} {
    %c0 = arith.constant 0 : index
    %c0_0 = arith.constant 0 : index
    %0 = vector.load %arg1[%c0, %c0_0] : memref<8x32xf32, #tpu.memory_space<vmem>>, vector<8x32xf32>
    %1 = arith.truncf %0 : vector<8x32xf32> to vector<8x32xbf16>
    %c0_1 = arith.constant 0 : index
    %c0_2 = arith.constant 0 : index
    %2 = vector.load %arg2[%c0_1, %c0_2] : memref<32x512xbf16, #tpu.memory_space<vmem>>, vector<32x512xbf16>
    %cst = arith.constant dense<0.000000e+00> : vector<8x512xf32>
    %3 = tpu.matmul %1, %2, %cst {dimension_numbers = #tpu.dot_dimension_numbers<[1], [0], [0], [1], [0, 0, 1, 1], [], []>} : vector<8x32xbf16>, vector<32x512xbf16>, vector<8x512xf32> -> vector<8x512xf32>
    %c0_3 = arith.constant 0 : index
    %c0_4 = arith.constant 0 : index
    %4 = vector.load %arg3[%c0_3, %c0_4] : memref<1x512xf32, #tpu.memory_space<vmem>>, vector<1x512xf32>
    %5 = vector.broadcast %4 : vector<1x512xf32> to vector<8x512xf32>
    %6 = arith.addf %3, %5 : vector<8x512xf32>
    %cst_5 = arith.constant 0.000000e+00 : f32
    %7 = vector.broadcast %cst_5 : f32 to vector<8x512xf32>
    %8 = arith.maximumf %6, %7 : vector<8x512xf32>
    %9 = arith.truncf %8 : vector<8x512xf32> to vector<8x512xbf16>
    %c0_6 = arith.constant 0 : index
    %c0_7 = arith.constant 0 : index
    %10 = vector.load %arg4[%c0_6, %c0_7] : memref<1x512xbf16, #tpu.memory_space<vmem>>, vector<1x512xbf16>
    %cst_8 = arith.constant dense<0.000000e+00> : vector<1x8xf32>
    %11 = tpu.matmul %10, %9, %cst_8 {dimension_numbers = #tpu.dot_dimension_numbers<[1], [1], [0], [0], [0, 0, 1, 0], [], []>} : vector<1x512xbf16>, vector<8x512xbf16>, vector<1x8xf32> -> vector<1x8xf32>
    %c0_9 = arith.constant 0 : index
    %c0_10 = arith.constant 0 : index
    %12 = memref.load %arg5[%c0_9, %c0_10] : memref<1x1xf32, #tpu.memory_space<smem>>
    %13 = vector.broadcast %12 : f32 to vector<1x8xf32>
    %14 = arith.addf %11, %13 : vector<1x8xf32>
    %c0_11 = arith.constant 0 : index
    %c0_12 = arith.constant 0 : index
    %15 = vector.load %arg6[%c0_11, %c0_12] : memref<1x8xf32, #tpu.memory_space<vmem>>, vector<1x8xf32>
    tpu.vector_store %arg6[%c0_11, %c0_12], %14 {strides = array<i32>} : memref<1x8xf32, #tpu.memory_space<vmem>>, vector<1x8xf32>,
    return
  }
  func.func @transform_0(%arg0: i32) -> (i32, i32) {
    %c0_i32 = arith.constant 0 : i32
    %c0_i32_0 = arith.constant 0 : i32
    return %arg0, %c0_i32 : i32, i32
  }
  func.func @transform_1(%arg0: i32) -> (i32, i32) {
    %c0_i32 = arith.constant 0 : i32
    %c0_i32_0 = arith.constant 0 : i32
    %c0_i32_1 = arith.constant 0 : i32
    return %c0_i32, %c0_i32_0 : i32, i32
  }
  func.func @transform_2(%arg0: i32) -> (i32, i32) {
    %c0_i32 = arith.constant 0 : i32
    %c0_i32_0 = arith.constant 0 : i32
    %c0_i32_1 = arith.constant 0 : i32
    return %c0_i32, %c0_i32_0 : i32, i32
  }
  func.func @transform_3(%arg0: i32) -> (i32, i32) {
    %c0_i32 = arith.constant 0 : i32
    %c0_i32_0 = arith.constant 0 : i32
    %c0_i32_1 = arith.constant 0 : i32
    return %c0_i32, %c0_i32_0 : i32, i32
  }
  func.func @transform_4(%arg0: i32) -> (i32, i32) {
    %c0_i32 = arith.constant 0 : i32
    %c0_i32_0 = arith.constant 0 : i32
    %c0_i32_1 = arith.constant 0 : i32
    return %c0_i32, %c0_i32_0 : i32, i32
  }
  func.func @transform_5(%arg0: i32) -> (i32, i32) {
    %c0_i32 = arith.constant 0 : i32
    %c0_i32_0 = arith.constant 0 : i32
    return %c0_i32, %arg0 : i32, i32
  }
}

</mosaic_0001>

<llo_original>
// kernel: resnet_feature_extractor.1
$region0: #{resnet_feature_extractor.1}
  #allocation0 [shape = 'u32[]', space=smem, size = 0x4, offset = 0x4, fixed_abs, tag = 'smem constant byte address 0x4 - core index']
  #allocation1 [shape = 'u32[144,128]{1,0:T(1,128)}', space=vmem, size = 0x12000, scoped, tag = 'internal scratch']
  #allocation2 [shape = 'f32[1,1]{1,0:T(1,128)S(6)}', space=smem, size = 0x200, scoped, tag = 'scoped memory for resnet_feature_extractor.1']
  %s0 = inlined_call_operand.vmem [shape: f32[8,32], index: 0, kind: input, shape index: {}]
  %s1 = inlined_call_operand.vmem [shape: bf16[32,512], index: 1, kind: input, shape index: {}]
  %s2 = inlined_call_operand.vmem [shape: f32[1,512], index: 2, kind: input, shape index: {}]
  %s3 = inlined_call_operand.vmem [shape: bf16[1,512], index: 3, kind: input, shape index: {}]
  %s4 = inlined_call_operand.<no memory space> [shape: f32[1,1], index: 4, kind: input, shape index: {}]
  %s5 = inlined_call_operand.hbm [shape: f32[1,8], index: 5, kind: output, shape index: {}]
  %s6 = sld [smem:[#allocation0]]
  $region30: #{resnet_feature_extractor.1} parent=0
    _
  %s8 = ssub.s32 1, %s6
  %s9 = scalar_select 0, %s8, %s6
  %10 = sst [smem:[#allocation2]] %s4
  $region1: #{resnet_feature_extractor.1} parent=0
    #allocation3 [shape = 'u8[512]{0}', space=vmem, size = 0x400, scoped, tag = 'output window, operand 0, single buffered']
    #allocation4 [shape = 's32[1]{0}', space=sflag, size = 0x4, scoped, tag = 'scoped memory for resnet_feature_extractor.1']
    %11 = vsyncpa [#allocation4], 0
    // Predicated region
    $region2: #{resnet_feature_extractor.1} parent=1 // pred_check
      _
    $region3: #{resnet_feature_extractor.1} parent=1 // pred_check_branch
      %13 = sbr.rel (0) target = $region5
    $region4: #{resnet_feature_extractor.1} parent=1 // pred_region
      _
    $region5: #{resnet_feature_extractor.1} parent=1 // pred_fallthru
      _
    // Predicated region
    $region6: #{resnet_feature_extractor.1} parent=1 // pred_check
      _
    $region7: #{resnet_feature_extractor.1} parent=1 // pred_check_branch
      %15 = sbr.rel (0) target = $region9
    $region8: #{resnet_feature_extractor.1} parent=1 // pred_region
      _
    $region9: #{resnet_feature_extractor.1} parent=1 // pred_fallthru
      _
    // Predicated region
    $region10: #{resnet_feature_extractor.1} parent=1 // pred_check
      _
    $region11: #{resnet_feature_extractor.1} parent=1 // pred_check_branch
      %17 = sbr.rel (0) target = $region13
    $region12: #{resnet_feature_extractor.1} parent=1 // pred_region
      _
    $region13: #{resnet_feature_extractor.1} parent=1 // pred_fallthru
      _
    // Predicated region
    $region14: #{resnet_feature_extractor.1} parent=1 // pred_check
      _
    $region15: #{resnet_feature_extractor.1} parent=1 // pred_check_branch
      %19 = sbr.rel (0) target = $region17
    $region16: #{resnet_feature_extractor.1} parent=1 // pred_region
      _
    $region17: #{resnet_feature_extractor.1} parent=1 // pred_fallthru
      _
    // Predicated region
    $region18: #{resnet_feature_extractor.1} parent=1 // pred_check
      _
    $region19: #{resnet_feature_extractor.1} parent=1 // pred_check_branch
      %21 = sbr.rel (0) target = $region21
    $region20: #{resnet_feature_extractor.1} parent=1 // pred_region
      _
    $region21: #{resnet_feature_extractor.1} parent=1 // pred_fallthru
      _
    %v23 = vld [vmem:[%s0] sm:$0xff]
    %v24 = vpack.c.bf16 %v23, %v23
    %v25 = vld [vmem:[%s1] sm:$0xff]
    %v26 = vld [vmem:[%s1 + $0x8] sm:$0xff]
    %v27 = vld [vmem:[%s1 + $0x10] sm:$0xff]
    %v28 = vld [vmem:[%s1 + $0x18] sm:$0xff]
    %v29 = vld [vmem:[%s1 + $0x20] sm:$0xff]
    %v30 = vld [vmem:[%s1 + $0x28] sm:$0xff]
    %v31 = vld [vmem:[%s1 + $0x30] sm:$0xff]
    %v32 = vld [vmem:[%s1 + $0x38] sm:$0xff]
    %v33 = vld [vmem:[%s2] sm:$0xf]
    %v35 = vlaneseq
    %v36 = vshrl.u32 %v35, 7
    %v37 = vsub.s32 0, %v36
    %v38 = vrot.slane %v33, %v37
    %v39 = vlaneseq
    %v40 = vshrl.u32 %v39, 7
    %v41 = vsub.s32 1, %v40
    %v42 = vrot.slane %v33, %v41
    %v43 = vlaneseq
    %v44 = vshrl.u32 %v43, 7
    %v45 = vsub.s32 2, %v44
    %v46 = vrot.slane %v33, %v45
    %v47 = vlaneseq
    %v48 = vshrl.u32 %v47, 7
    %v49 = vsub.s32 3, %v48
    %v50 = vrot.slane %v33, %v49
    %v63 = vunpack.c.l.b16 %v25
    %v64 = vunpack.c.h.b16 %v25
    %v65 = vunpack.c.l.b16 %v26
    %v66 = vunpack.c.h.b16 %v26
    %v67 = vunpack.c.l.b16 %v27
    %v68 = vunpack.c.h.b16 %v27
    %v69 = vunpack.c.l.b16 %v28
    %v70 = vunpack.c.h.b16 %v28
    %v71 = vunpack.c.l.b16 %v29
    %v72 = vunpack.c.h.b16 %v29
    %v73 = vunpack.c.l.b16 %v30
    %v74 = vunpack.c.h.b16 %v30
    %v75 = vunpack.c.l.b16 %v31
    %v76 = vunpack.c.h.b16 %v31
    %v77 = vunpack.c.l.b16 %v32
    %v78 = vunpack.c.h.b16 %v32
    %v79 = vpack.c.b16 %v67, %v63
    %v80 = vpack.c.b16 %v68, %v64
    %v81 = vpack.c.b16 %v69, %v65
    %v82 = vpack.c.b16 %v70, %v66
    %v83 = vpack.c.b16 %v75, %v71
    %v84 = vpack.c.b16 %v76, %v72
    %v85 = vpack.c.b16 %v77, %v73
    %v86 = vpack.c.b16 %v78, %v74
    %vm95 = vcmask 261120
    %v97 = vsel %vm95, %v24, 0
    %99 = vmatprep.subr.bf16.mxu0 %v80
    %100 = vmatpush1.bf16.msra.mxu0 %v79
    %101 = vmatprep.subr.bf16.mxu0 %v84
    %102 = vmatpush1.bf16.msra.mxu0 %v83
    %103 = vmatprep.subr.bf16.mxu0 0
    %104 = vmatpush1.bf16.msra.mxu0 0
    %105 = vmatprep.subr.bf16.mxu0 0
    %106 = vmatpush1.bf16.msra.mxu0 0
    %107 = vmatprep.subr.bf16.mxu0 0
    %108 = vmatpush1.bf16.msra.mxu0 0
    %109 = vmatprep.subr.bf16.mxu0 0
    %110 = vmatpush1.bf16.msra.mxu0 0
    %111 = vmatprep.subr.bf16.mxu0 0
    %112 = vmatpush1.bf16.msra.mxu0 0
    %113 = vmatprep.subr.bf16.mxu0 0
    %114 = vmatpush1.bf16.msra.mxu0 0
    %115 = vmatprep.subr.bf16.mxu0 0
    %116 = vmatpush1.bf16.msra.mxu0 0
    %117 = vmatprep.subr.bf16.mxu0 0
    %118 = vmatpush1.bf16.msra.mxu0 0
    %119 = vmatprep.subr.bf16.mxu0 0
    %120 = vmatpush1.bf16.msra.mxu0 0
    %121 = vmatprep.subr.bf16.mxu0 0
    %122 = vmatpush1.bf16.msra.mxu0 0
    %123 = vmatprep.subr.bf16.mxu0 0
    %124 = vmatpush1.bf16.msra.mxu0 0
    %125 = vmatprep.subr.bf16.mxu0 0
    %126 = vmatpush1.bf16.msra.mxu0 0
    %127 = vmatprep.subr.bf16.mxu0 0
    %128 = vmatpush1.bf16.msra.mxu0 0
    %129 = vmatprep.subr.bf16.mxu0 0
    %130 = vmatpush1.bf16.msra.mxu0 0
    %131 = vmatprep.mubr.bf16.mxu0 0
    %132 = vmatmul.mubr.bf16.gmra.mrb[0].mxu0 %v97
    %v133 = vpop.f32.mrb[0].mxu0
    %v134 = vadd.f32 %v38, %v133
    %v135 = vpop.f32.mrb[0].mxu0
    %v136 = vadd.f32 %v42, %v135
    %v137 = vpop.f32.mrb[0].mxu0
    %v138 = vpop.f32.mrb[0].mxu0
    %139 = vdwg.mxu0
    %140 = vmatprep.subr.bf16.mxu0 %v82
    %141 = vmatpush1.bf16.msra.mxu0 %v81
    %142 = vmatprep.subr.bf16.mxu0 %v86
    %143 = vmatpush1.bf16.msra.mxu0 %v85
    %144 = vmatprep.subr.bf16.mxu0 0
    %145 = vmatpush1.bf16.msra.mxu0 0
    %146 = vmatprep.subr.bf16.mxu0 0
    %147 = vmatpush1.bf16.msra.mxu0 0
    %148 = vmatprep.subr.bf16.mxu0 0
    %149 = vmatpush1.bf16.msra.mxu0 0
    %150 = vmatprep.subr.bf16.mxu0 0
    %151 = vmatpush1.bf16.msra.mxu0 0
    %152 = vmatprep.subr.bf16.mxu0 0
    %153 = vmatpush1.bf16.msra.mxu0 0
    %154 = vmatprep.subr.bf16.mxu0 0
    %155 = vmatpush1.bf16.msra.mxu0 0
    %156 = vmatprep.subr.bf16.mxu0 0
    %157 = vmatpush1.bf16.msra.mxu0 0
    %158 = vmatprep.subr.bf16.mxu0 0
    %159 = vmatpush1.bf16.msra.mxu0 0
    %160 = vmatprep.subr.bf16.mxu0 0
    %161 = vmatpush1.bf16.msra.mxu0 0
    %162 = vmatprep.subr.bf16.mxu0 0
    %163 = vmatpush1.bf16.msra.mxu0 0
    %164 = vmatprep.subr.bf16.mxu0 0
    %165 = vmatpush1.bf16.msra.mxu0 0
    %166 = vmatprep.subr.bf16.mxu0 0
    %167 = vmatpush1.bf16.msra.mxu0 0
    %168 = vmatprep.subr.bf16.mxu0 0
    %169 = vmatpush1.bf16.msra.mxu0 0
    %170 = vmatprep.subr.bf16.mxu0 0
    %171 = vmatpush1.bf16.msra.mxu0 0
    %172 = vmatprep.mubr.bf16.mxu0 0
    %173 = vmatmul.mubr.bf16.gmra.mrb[0].mxu0 %v97
    %v174 = vpop.f32.mrb[0].mxu0
    %v175 = vadd.f32 %v46, %v174
    %v176 = vpop.f32.mrb[0].mxu0
    %v177 = vadd.f32 %v50, %v176
    %v178 = vpop.f32.mrb[0].mxu0
    %v179 = vpop.f32.mrb[0].mxu0
    %180 = vdwg.mxu0
    %v181 = vmax.f32 %v134, 0.0
    %v182 = vmax.f32 %v136, 0.0
    %v183 = vmax.f32 %v175, 0.0
    %v184 = vmax.f32 %v177, 0.0
    %v185 = vpack.c.bf16 %v181, %v181
    %v186 = vpack.c.bf16 %v182, %v182
    %v187 = vpack.c.bf16 %v183, %v183
    %v188 = vpack.c.bf16 %v184, %v184
    %v189 = vld [vmem:[%s3] sm:$0xf]
    %s190 = sld [smem:[#allocation2]]
    %v191 = vstv %s190
    %v194 = vunpack.c.l.s4 1966171168
    %v195 = vunpack.c.0.s8 %v194
    %v196 = vlaneseq
    %v197 = vshrl.u32 %v196, 7
    %v198 = vsub.s32 %v195, %v197
    %v199 = vrot.slane %v189, %v198
    %v200 = vcombine.high %v199, %v199
    %v202 = vunpack.c.l.s4 1966171168
    %v203 = vunpack.c.0.s8 %v202
    %v204 = vlaneseq
    %v205 = vshrl.u32 %v204, 7
    %v206 = vsub.s32 %v203, %v205
    %v207 = vrot.slane %v199, %v206
    %v209 = vunpack.c.l.s4 1966171168
    %v210 = vunpack.c.0.s8 %v209
    %v211 = vlaneseq
    %v212 = vshrl.u32 %v211, 7
    %v213 = vsub.s32 %v210, %v212
    %v214 = vrot.slane %v200, %v213
    %v215 = vcombine.high %v207, %v207
    %v216 = vcombine.high %v214, %v214
    %221 = vmatprep.subr.bf16.mxu0 %v186
    %222 = vmatpush1.bf16.xpose.msra.mxu0 %v185
    %223 = vmatprep.subr.bf16.mxu0 0
    %224 = vmatpush1.bf16.xpose.msra.mxu0 0
    %225 = vmatprep.subr.bf16.mxu0 0
    %226 = vmatpush1.bf16.xpose.msra.mxu0 0
    %227 = vmatprep.subr.bf16.mxu0 0
    %228 = vmatpush1.bf16.xpose.msra.mxu0 0
    %229 = vmatprep.subr.bf16.mxu0 0
    %230 = vmatpush1.bf16.xpose.msra.mxu0 0
    %231 = vmatprep.subr.bf16.mxu0 0
    %232 = vmatpush1.bf16.xpose.msra.mxu0 0
    %233 = vmatprep.subr.bf16.mxu0 0
    %234 = vmatpush1.bf16.xpose.msra.mxu0 0
    %235 = vmatprep.subr.bf16.mxu0 0
    %236 = vmatpush1.bf16.xpose.msra.mxu0 0
    %237 = vmatprep.subr.bf16.mxu0 0
    %238 = vmatpush1.bf16.xpose.msra.mxu0 0
    %239 = vmatprep.subr.bf16.mxu0 0
    %240 = vmatpush1.bf16.xpose.msra.mxu0 0
    %241 = vmatprep.subr.bf16.mxu0 0
    %242 = vmatpush1.bf16.xpose.msra.mxu0 0
    %243 = vmatprep.subr.bf16.mxu0 0
    %244 = vmatpush1.bf16.xpose.msra.mxu0 0
    %245 = vmatprep.subr.bf16.mxu0 0
    %246 = vmatpush1.bf16.xpose.msra.mxu0 0
    %247 = vmatprep.subr.bf16.mxu0 0
    %248 = vmatpush1.bf16.xpose.msra.mxu0 0
    %249 = vmatprep.subr.bf16.mxu0 0
    %250 = vmatpush1.bf16.xpose.msra.mxu0 0
    %251 = vmatprep.subr.bf16.mxu0 0
    %252 = vmatpush1.bf16.xpose.msra.mxu0 0
    %253 = vmatprep.mubr.bf16.mxu0 %v214
    %254 = vmatmul.mubr.bf16.gmra.mrb[0].mxu0 %v207
    %v255 = vpop.f32.mrb[0].mxu0
    %v256 = vadd.f32 %v191, %v255
    %v257 = vpop.f32.mrb[0].mxu0
    %v258 = vpop.f32.mrb[0].mxu0
    %v259 = vpop.f32.mrb[0].mxu0
    %260 = vdwg.mxu0
    %261 = vmatprep.subr.bf16.mxu0 %v188
    %262 = vmatpush1.bf16.xpose.msra.mxu0 %v187
    %263 = vmatprep.subr.bf16.mxu0 0
    %264 = vmatpush1.bf16.xpose.msra.mxu0 0
    %265 = vmatprep.subr.bf16.mxu0 0
    %266 = vmatpush1.bf16.xpose.msra.mxu0 0
    %267 = vmatprep.subr.bf16.mxu0 0
    %268 = vmatpush1.bf16.xpose.msra.mxu0 0
    %269 = vmatprep.subr.bf16.mxu0 0
    %270 = vmatpush1.bf16.xpose.msra.mxu0 0
    %271 = vmatprep.subr.bf16.mxu0 0
    %272 = vmatpush1.bf16.xpose.msra.mxu0 0
    %273 = vmatprep.subr.bf16.mxu0 0
    %274 = vmatpush1.bf16.xpose.msra.mxu0 0
    %275 = vmatprep.subr.bf16.mxu0 0
    %276 = vmatpush1.bf16.xpose.msra.mxu0 0
    %277 = vmatprep.subr.bf16.mxu0 0
    %278 = vmatpush1.bf16.xpose.msra.mxu0 0
    %279 = vmatprep.subr.bf16.mxu0 0
    %280 = vmatpush1.bf16.xpose.msra.mxu0 0
    %281 = vmatprep.subr.bf16.mxu0 0
    %282 = vmatpush1.bf16.xpose.msra.mxu0 0
    %283 = vmatprep.subr.bf16.mxu0 0
    %284 = vmatpush1.bf16.xpose.msra.mxu0 0
    %285 = vmatprep.subr.bf16.mxu0 0
    %286 = vmatpush1.bf16.xpose.msra.mxu0 0
    %287 = vmatprep.subr.bf16.mxu0 0
    %288 = vmatpush1.bf16.xpose.msra.mxu0 0
    %289 = vmatprep.subr.bf16.mxu0 0
    %290 = vmatpush1.bf16.xpose.msra.mxu0 0
    %291 = vmatprep.subr.bf16.mxu0 0
    %292 = vmatpush1.bf16.xpose.msra.mxu0 0
    %293 = vmatprep.mubr.bf16.mxu0 %v216
    %294 = vmatmul.mubr.bf16.gmra.mrb[0].mxu0 %v215
    %v295 = vpop.f32.mrb[0].mxu0
    %v296 = vadd.f32 %v256, %v295
    %v297 = vpop.f32.mrb[0].mxu0
    %v298 = vpop.f32.mrb[0].mxu0
    %v299 = vpop.f32.mrb[0].mxu0
    %300 = vdwg.mxu0
    %vm301 = vcmask 57344
    %302 = vst.msk [vmem:[#allocation3] sm:$0x1] %vm301, %v296
    // Predicated region
    $region22: #{resnet_feature_extractor.1} parent=1 // pred_check
      _
    $region23: #{resnet_feature_extractor.1} parent=1 // pred_check_branch
      %304 = sbr.rel (0) target = $region25
    $region24: #{resnet_feature_extractor.1} parent=1 // pred_region
      %s306 = ssub.s32 16, 16
      %307 = vsyncadd [#allocation4], %s306
      %s309 = sshll.u32 [#allocation3], 4
      %s310 = int_to_ptr.vmem [resolvable:$true] %s309
      %312 = dma.vmem_to_hbm [thread:$0]  %s310, 16, %s5, [#allocation4]
    $region25: #{resnet_feature_extractor.1} parent=1 // pred_fallthru
      _
    // Predicated region
    $region26: #{resnet_feature_extractor.1} parent=1 // pred_check
      _
    $region27: #{resnet_feature_extractor.1} parent=1 // pred_check_branch
      %314 = sbr.rel (0) target = $region29
    $region28: #{resnet_feature_extractor.1} parent=1 // pred_region
      %315 = dma.done [#allocation4], 16
    $region29: #{resnet_feature_extractor.1} parent=1 // pred_fallthru
      _
    %316 = vsyncpa [#allocation4], 1

</llo_original>
